<compile_context>
chip_gen: v6e
topology: v6e:2x2x1
jax: 0.10.0
libtpu: 0.0.40
codegen_flags: <defaults>
</compile_context>

<pallas_src>
import functools

import jax
import jax.numpy as jnp
from jax.experimental import pallas as pl
from jax.experimental.pallas import tpu as pltpu


def _is_small_int(g):
    return float(g).is_integer() and 0 <= float(g) <= 8


def _ipow(b, g):
    """b**g for a small non-negative Python int g, as VPU multiplies."""
    if g == 0:
        return jnp.ones_like(b)
    r = None
    p = b
    e = g
    while e:
        if e & 1:
            r = p if r is None else r * p
        e >>= 1
        if e:
            p = p * p
    return r


def _asl_kernel(x_ref, y_ref, part_ref, *, gamma_neg, gamma_pos, clip, eps,
                binary_targets):
    x = x_ref[...].astype(jnp.float32)
    y = y_ref[...].astype(jnp.float32)

    x_sigmoid = jax.nn.sigmoid(x)
    xs_pos = x_sigmoid
    xs_neg = 1.0 - x_sigmoid
    if clip is not None and clip > 0:
        xs_neg = jnp.minimum(xs_neg + clip, 1.0)

    if binary_targets:
        # y in {0,1}:  y*log(xs_pos) + (1-y)*log(xs_neg) == log(select) and
        # pt = xs_pos*y + xs_neg*(1-y) == select  -> one log per element.
        is_pos = y > 0.0
        pt = jnp.where(is_pos, xs_pos, xs_neg)
        loss = jnp.log(jnp.maximum(pt, eps))
        if gamma_neg > 0 or gamma_pos > 0:
            b = 1.0 - pt
            if _is_small_int(gamma_pos) and _is_small_int(gamma_neg):
                w = jnp.where(is_pos,
                              _ipow(b, int(gamma_pos)),
                              _ipow(b, int(gamma_neg)))
            else:
                gamma = jnp.where(is_pos,
                                  jnp.float32(gamma_pos),
                                  jnp.float32(gamma_neg))
                w = jnp.power(b, gamma)
            loss = loss * w
    else:
        # Exact original two-branch formula (supports soft / smoothed targets).
        los_pos = y * jnp.log(jnp.maximum(xs_pos, eps))
        los_neg = (1.0 - y) * jnp.log(jnp.maximum(xs_neg, eps))
        loss = los_pos + los_neg
        if gamma_neg > 0 or gamma_pos > 0:
            pt = xs_pos * y + xs_neg * (1.0 - y)
            one_sided_gamma = gamma_pos * y + gamma_neg * (1.0 - y)
            loss = loss * jnp.power(1.0 - pt, one_sided_gamma)

    # Lane-dense partial sum for this tile (reduce only the sublane axis here;
    # the cheap cross-lane + cross-tile reduce happens in the wrapper).
    part_ref[...] = jnp.sum(loss, axis=0, keepdims=True).reshape(part_ref.shape)


def _sublane(itemsize):
    return {4: 8, 2: 16, 1: 32}.get(itemsize, 8)


def _pick_tile_n(N, C, x_dtype, y_dtype):
    """Pick a row-tile: ~2 MiB per input block, >= ~8 grid steps, divides N."""
    ix = jnp.dtype(x_dtype).itemsize
    iy = jnp.dtype(y_dtype).itemsize
    sub = max(_sublane(ix), _sublane(iy))
    if N <= sub:
        return N
    bytes_per_row = max(C * (ix + iy), 1)
    t = max(sub, (4 << 20) // bytes_per_row)   # ~4 MiB across the two inputs
    t = min(t, N)
    t = min(t, max(sub, N // 8))               # keep pipeline depth when possible
    t = max(sub, (t // sub) * sub)
    while t > sub and N % t != 0:
        t -= sub
    if N % t != 0:
        return N                               # ragged N: single full block
    return t


def asymmetric_loss(x, y, *, gamma_neg=4, gamma_pos=1, clip=0.05, eps=1e-8,
                    tile_n=None, binary_targets=True):
    """x: [N, C] logits, y: [N, C] multi-label targets. Returns scalar f32 loss."""
    N, C = x.shape
    assert y.shape == (N, C)
    if tile_n is None:
        tile_n = _pick_tile_n(N, C, x.dtype, y.dtype)
    assert N % tile_n == 0, (N, tile_n)
    grid_n = N // tile_n

    kernel = functools.partial(
        _asl_kernel, gamma_neg=gamma_neg, gamma_pos=gamma_pos,
        clip=clip, eps=eps, binary_targets=binary_targets)

    partials = pl.pallas_call(
        kernel,
        out_shape=jax.ShapeDtypeStruct((grid_n, 1, C), jnp.float32),
        grid_spec=pltpu.PrefetchScalarGridSpec(
            num_scalar_prefetch=0,
            grid=(grid_n,),
            in_specs=[
                pl.BlockSpec((tile_n, C), lambda i: (i, 0)),
                pl.BlockSpec((tile_n, C), lambda i: (i, 0)),
            ],
            out_specs=pl.BlockSpec((1, 1, C), lambda i: (i, 0, 0)),
        ),
        compiler_params=pltpu.CompilerParams(
            dimension_semantics=("parallel",)),
    )(x, y)
    # Tiny final reduce + negation outside the kernel (no loop-carried dep).
    return -jnp.sum(partials)


def asymmetric_loss_ref(x, y, *, gamma_neg=4, gamma_pos=1, clip=0.05, eps=1e-8):
    x = x.astype(jnp.float32)
    y = y.astype(jnp.float32)
    x_sigmoid = jax.nn.sigmoid(x)
    xs_pos = x_sigmoid
    xs_neg = 1.0 - x_sigmoid
    if clip is not None and clip > 0:
        xs_neg = jnp.minimum(xs_neg + clip, 1.0)
    los_pos = y * jnp.log(jnp.maximum(xs_pos, eps))
    los_neg = (1.0 - y) * jnp.log(jnp.maximum(xs_neg, eps))
    loss = los_pos + los_neg
    if gamma_neg > 0 or gamma_pos > 0:
        pt = xs_pos * y + xs_neg * (1.0 - y)
        gamma = gamma_pos * y + gamma_neg * (1.0 - y)
        loss = loss * jnp.power(1.0 - pt, gamma)
    return -jnp.sum(loss)


if __name__ == "__main__":
    key = jax.random.PRNGKey(0)
    kx, ky = jax.random.split(key)
    # Small multi-label problem: batch=64, classes=128 (lane-aligned).
    # Tile picker -> tile_n=8, grid=(8,), exercising the pipelined path.
    N, C = 64, 128
    x = jax.random.normal(kx, (N, C), dtype=jnp.float32)
    y = (jax.random.uniform(ky, (N, C)) > 0.7).astype(jnp.float32)

    out = asymmetric_loss(x, y)
    out = jax.block_until_ready(out)

    ref = asymmetric_loss_ref(x, y)
    assert jnp.allclose(out, ref, rtol=1e-4, atol=1e-4), (out, ref)
    print("KERNEL_OK")
</pallas_src>

<mosaic_0001>
module attributes {stable_mosaic.version = 11 : i64} {
  func.func @_asl_kernel(%arg0: i32, %arg1: memref<8x128xf32, #tpu.memory_space<vmem>>, %arg2: memref<8x128xf32, #tpu.memory_space<vmem>>, %arg3: memref<1x1x128xf32, #tpu.memory_space<vmem>>) attributes {dimension_semantics = [#tpu.dimension_semantics<parallel>], iteration_bounds = array<i64: 8>, scalar_prefetch = 0 : i64, scratch_operands = 0 : i64, tpu.core_type = #tpu.core_type<tc>, window_params = [{transform_indices = @transform_0, window_bounds = array<i64: 8, 128>}, {transform_indices = @transform_1, window_bounds = array<i64: 8, 128>}, {transform_indices = @transform_2, window_bounds = array<i64: 1, 1, 128>}]} {
    %c0 = arith.constant 0 : index
    %c0_0 = arith.constant 0 : index
    %0 = vector.load %arg1[%c0, %c0_0] : memref<8x128xf32, #tpu.memory_space<vmem>>, vector<8x128xf32>
    %c0_1 = arith.constant 0 : index
    %c0_2 = arith.constant 0 : index
    %1 = vector.load %arg2[%c0_1, %c0_2] : memref<8x128xf32, #tpu.memory_space<vmem>>, vector<8x128xf32>
    %2 = arith.negf %0 : vector<8x128xf32>
    %3 = math.exp %2 : vector<8x128xf32>
    %cst = arith.constant 1.000000e+00 : f32
    %4 = vector.broadcast %cst : f32 to vector<8x128xf32>
    %5 = arith.addf %4, %3 : vector<8x128xf32>
    %6 = arith.divf %4, %5 : vector<8x128xf32>
    %cst_3 = arith.constant 1.000000e+00 : f32
    %7 = vector.broadcast %cst_3 : f32 to vector<8x128xf32>
    %8 = arith.subf %7, %6 : vector<8x128xf32>
    %cst_4 = arith.constant 5.000000e-02 : f32
    %9 = vector.broadcast %cst_4 : f32 to vector<8x128xf32>
    %10 = arith.addf %8, %9 : vector<8x128xf32>
    %cst_5 = arith.constant 1.000000e+00 : f32
    %11 = vector.broadcast %cst_5 : f32 to vector<8x128xf32>
    %12 = arith.minimumf %10, %11 : vector<8x128xf32>
    %cst_6 = arith.constant 0.000000e+00 : f32
    %13 = vector.broadcast %cst_6 : f32 to vector<8x128xf32>
    %14 = arith.cmpf ogt, %1, %13 : vector<8x128xf32>
    %15 = arith.select %14, %6, %12 : vector<8x128xi1>, vector<8x128xf32>
    %cst_7 = arith.constant 9.99999993E-9 : f32
    %16 = vector.broadcast %cst_7 : f32 to vector<8x128xf32>
    %17 = arith.maximumf %15, %16 : vector<8x128xf32>
    %18 = math.log %17 : vector<8x128xf32>
    %cst_8 = arith.constant 1.000000e+00 : f32
    %19 = vector.broadcast %cst_8 : f32 to vector<8x128xf32>
    %20 = arith.subf %19, %15 : vector<8x128xf32>
    %21 = arith.mulf %20, %20 : vector<8x128xf32>
    %22 = arith.mulf %21, %21 : vector<8x128xf32>
    %23 = arith.select %14, %20, %22 : vector<8x128xi1>, vector<8x128xf32>
    %24 = arith.mulf %18, %23 : vector<8x128xf32>
    %cst_9 = arith.constant dense<0.000000e+00> : vector<128xf32>
    %25 = vector.multi_reduction <add>, %24, %cst_9 [0] : vector<8x128xf32> to vector<128xf32>
    %26 = vector.shape_cast %25 : vector<128xf32> to vector<1x128xf32>
    %27 = vector.shape_cast %26 : vector<1x128xf32> to vector<1x1x128xf32>
    %c0_10 = arith.constant 0 : index
    %c0_11 = arith.constant 0 : index
    %c0_12 = arith.constant 0 : index
    %28 = vector.load %arg3[%c0_10, %c0_11, %c0_12] : memref<1x1x128xf32, #tpu.memory_space<vmem>>, vector<1x1x128xf32>
    tpu.vector_store %arg3[%c0_10, %c0_11, %c0_12], %27 {strides = array<i32>} : memref<1x1x128xf32, #tpu.memory_space<vmem>>, vector<1x1x128xf32>,
    return
  }
  func.func @transform_0(%arg0: i32) -> (i32, i32) {
    %c0_i32 = arith.constant 0 : i32
    %c0_i32_0 = arith.constant 0 : i32
    return %arg0, %c0_i32 : i32, i32
  }
  func.func @transform_1(%arg0: i32) -> (i32, i32) {
    %c0_i32 = arith.constant 0 : i32
    %c0_i32_0 = arith.constant 0 : i32
    return %arg0, %c0_i32 : i32, i32
  }
  func.func @transform_2(%arg0: i32) -> (i32, i32, i32) {
    %c0_i32 = arith.constant 0 : i32
    %c0_i32_0 = arith.constant 0 : i32
    %c0_i32_1 = arith.constant 0 : i32
    return %arg0, %c0_i32, %c0_i32_0 : i32, i32, i32
  }
}

</mosaic_0001>

<llo_original>
// kernel: tpu_custom_call.1
$region0: #{tpu_custom_call.1}
  #allocation0 [shape = 'u32[]', space=smem, size = 0x4, offset = 0x4, fixed_abs, tag = 'smem constant byte address 0x4 - core index']
  #allocation1 [shape = 'u32[144,128]{1,0:T(1,128)}', space=vmem, size = 0x12000, scoped, tag = 'internal scratch']
  %s0 = inlined_call_operand.hbm [shape: f32[64,128], index: 0, kind: input, shape index: {}]
  %s1 = inlined_call_operand.hbm [shape: f32[64,128], index: 1, kind: input, shape index: {}]
  %s2 = inlined_call_operand.hbm [shape: f32[8,1,128], index: 2, kind: output, shape index: {}]
  %s3 = sld [smem:[#allocation0]]
  $region49: #{tpu_custom_call.1} parent=0
    _
  %s5 = ssub.s32 1, %s3
  %s6 = scalar_select 0, %s5, %s3
  $region1: #{tpu_custom_call.1} parent=0
    #allocation2 [shape = 'u8[8192]{0}', space=vmem, size = 0x2000, scoped, tag = 'input window, operand 0']
    #allocation3 [shape = 's32[2]{0}', space=sflag, size = 0x8, scoped, tag = 'scoped memory for tpu_custom_call.1']
    #allocation4 [shape = 's32[2]{0}', space=sflag, size = 0x8, scoped, tag = 'scoped memory for tpu_custom_call.1']
    #allocation5 [shape = 'u8[8192]{0}', space=vmem, size = 0x2000, scoped, tag = 'input window, operand 1']
    #allocation6 [shape = 's32[2]{0}', space=sflag, size = 0x8, scoped, tag = 'scoped memory for tpu_custom_call.1']
    #allocation7 [shape = 'u8[1024]{0}', space=vmem, size = 0x400, scoped, tag = 'output window, operand 0']
    %7 = vsyncpa [#allocation3], 0
    %s8 = scalar_lea.sflag [#allocation3], 1
    %9 = vsyncpa %s8, 0
    %10 = vsyncpa [#allocation6], 0
    %s11 = scalar_lea.sflag [#allocation6], 1
    %12 = vsyncpa %s11, 0
    %13 = vsyncpa [#allocation4], 0
    %s14 = scalar_lea.sflag [#allocation4], 1
    %15 = vsyncpa %s14, 0
    loop: start=0, step=1, limit=10
    $region2: #{tpu_custom_call.1} parent=1 // loop_pre_header
      _
    $region3: #{tpu_custom_call.1} parent=1 // loop_header
      %s17 = sphi 0, %s21
      %p18 = scmp.ge.s32.totalorder %s17, 10
      %s27 = sphi 0, %s29
      %s30 = sphi 0, %s27
      %s31 = sphi 0, %s30
      %s47 = sphi 0, %s31
      %s53 = sphi 0, %s55
      %s56 = sphi 0, %s53
      %s57 = sphi 0, %s56
      %s73 = sphi 0, %s57
      %s79 = sphi 0, %s81
      %s82 = sphi 0, %s79
      %s83 = sphi 0, %s82
      %s99 = sphi 0, %s83
    $region4: #{tpu_custom_call.1} parent=1 // loop_header_branch
      %20 = sbr.rel (%p18) target = $region8
    $region5: #{tpu_custom_call.1} parent=1 // loop_body
      %s22 = ssub.s32 %s17, 1
      %s23 = ssub.s32 %s17, 2
      %s24 = sadd.s32 %s17, 1
      %s25 = ssub.s32 %s17, %s24
      %p26 = scmp.eq.s32.totalorder %s25, 0
      %s28 = sadd.s32 %s27, 1
      %s29 = scalar_select %p26, %s27, %s28
      %p32 = pneg %p26
      %p33 = scmp.eq.s32.totalorder %s17, 7
      %p34 = por %p32, %p33
      %p35 = scmp.ne.s32.totalorder %s27, %s30
      %p36 = scmp.eq.s32.totalorder %s17, 0
      %p37 = por %p35, %p36
      %p38 = scmp.ne.s32.totalorder %s27, %s30
      %p39 = scmp.eq.s32.totalorder %s22, 7
      %p40 = por %p38, %p39
      %p41 = scmp.ne.s32.totalorder %s30, %s31
      %p42 = scmp.eq.s32.totalorder %s22, 0
      %p43 = por %p41, %p42
      %p44 = scmp.ne.s32.totalorder %s30, %s31
      %p45 = scmp.eq.s32.totalorder %s23, 7
      %p46 = por %p44, %p45
      %p48 = scmp.ne.s32.totalorder %s31, %s47
      %p49 = scmp.eq.s32.totalorder %s23, 0
      %p50 = por %p48, %p49
      %s51 = ssub.s32 %s17, %s24
      %p52 = scmp.eq.s32.totalorder %s51, 0
      %s54 = sadd.s32 %s53, 1
      %s55 = scalar_select %p52, %s53, %s54
      %p58 = pneg %p52
      %p59 = scmp.eq.s32.totalorder %s17, 7
      %p60 = por %p58, %p59
      %p61 = scmp.ne.s32.totalorder %s53, %s56
      %p62 = scmp.eq.s32.totalorder %s17, 0
      %p63 = por %p61, %p62
      %p64 = scmp.ne.s32.totalorder %s53, %s56
      %p65 = scmp.eq.s32.totalorder %s22, 7
      %p66 = por %p64, %p65
      %p67 = scmp.ne.s32.totalorder %s56, %s57
      %p68 = scmp.eq.s32.totalorder %s22, 0
      %p69 = por %p67, %p68
      %p70 = scmp.ne.s32.totalorder %s56, %s57
      %p71 = scmp.eq.s32.totalorder %s23, 7
      %p72 = por %p70, %p71
      %p74 = scmp.ne.s32.totalorder %s57, %s73
      %p75 = scmp.eq.s32.totalorder %s23, 0
      %p76 = por %p74, %p75
      %s77 = ssub.s32 %s17, %s24
      %p78 = scmp.eq.s32.totalorder %s77, 0
      %s80 = sadd.s32 %s79, 1
      %s81 = scalar_select %p78, %s79, %s80
      %p84 = pneg %p78
      %p85 = scmp.eq.s32.totalorder %s17, 7
      %p86 = por %p84, %p85
      %p87 = scmp.ne.s32.totalorder %s79, %s82
      %p88 = scmp.eq.s32.totalorder %s17, 0
      %p89 = por %p87, %p88
      %p90 = scmp.ne.s32.totalorder %s79, %s82
      %p91 = scmp.eq.s32.totalorder %s22, 7
      %p92 = por %p90, %p91
      %p93 = scmp.ne.s32.totalorder %s82, %s83
      %p94 = scmp.eq.s32.totalorder %s22, 0
      %p95 = por %p93, %p94
      %p96 = scmp.ne.s32.totalorder %s82, %s83
      %p97 = scmp.eq.s32.totalorder %s23, 7
      %p98 = por %p96, %p97
      %p100 = scmp.ne.s32.totalorder %s83, %s99
      %p101 = scmp.eq.s32.totalorder %s23, 0
      %p102 = por %p100, %p101
      %p103 = scmp.le.s32.totalorder 1, %s17
      %p104 = scmp.lt.s32.totalorder %s17, 9
      %p105 = pnand %p103, %p104
      %p106 = pneg %p105
      // Predicated region
      $region9: #{tpu_custom_call.1} parent=5 // pred_check
        _
      $region10: #{tpu_custom_call.1} parent=5 // pred_check_branch
        %108 = sbr.rel (%p105) target = $region12
      $region11: #{tpu_custom_call.1} parent=5 // pred_region
        %s109 = ssub.s32 %s17, 1
      $region12: #{tpu_custom_call.1} parent=5 // pred_fallthru
        _
      %p110 = scmp.lt.s32.totalorder %s17, 8
      // Predicated region
      $region13: #{tpu_custom_call.1} parent=5 // pred_check
        %p111 = pneg %p110
      $region14: #{tpu_custom_call.1} parent=5 // pred_check_branch
        %113 = sbr.rel (%p111) target = $region16
      $region15: #{tpu_custom_call.1} parent=5 // pred_region
        // Predicated region
        $region17: #{tpu_custom_call.1} parent=15 // pred_check
          %p114 = pneg %p37
        $region18: #{tpu_custom_call.1} parent=15 // pred_check_branch
          %116 = sbr.rel (%p114) target = $region20
        $region19: #{tpu_custom_call.1} parent=15 // pred_region
          %s117 = sand.u32 %s27, 1
          %s118 = scalar_lea.sflag [#allocation3], %s117
          %s119 = sand.u32 %s27, 1
          %s120 = smul.addr %s119, 8
          %s121 = scalar_lea.vmem [#allocation2], %s120
          %s123 = ssub.s32 128, 128
          %124 = vsyncadd %s118, %s123
          %s125 = smul.addr %s17, 128
          %s126 = scalar_lea.hbm %s0, %s125
          %s128 = sshll.u32 %s121, 4
          %s129 = int_to_ptr.vmem [resolvable:$true] %s128
          %131 = dma.hbm_to_vmem [thread:$0]  %s126, 128, %s129, %s118
        $region20: #{tpu_custom_call.1} parent=15 // pred_fallthru
          _
        // Predicated region
        $region21: #{tpu_custom_call.1} parent=15 // pred_check
          %p132 = pneg %p63
        $region22: #{tpu_custom_call.1} parent=15 // pred_check_branch
          %134 = sbr.rel (%p132) target = $region24
        $region23: #{tpu_custom_call.1} parent=15 // pred_region
          %s135 = sand.u32 %s53, 1
          %s136 = scalar_lea.sflag [#allocation6], %s135
          %s137 = sand.u32 %s53, 1
          %s138 = smul.addr %s137, 8
          %s139 = scalar_lea.vmem [#allocation5], %s138
          %s141 = ssub.s32 128, 128
          %142 = vsyncadd %s136, %s141
          %s143 = smul.addr %s17, 128
          %s144 = scalar_lea.hbm %s1, %s143
          %s146 = sshll.u32 %s139, 4
          %s147 = int_to_ptr.vmem [resolvable:$true] %s146
          %149 = dma.hbm_to_vmem [thread:$0]  %s144, 128, %s147, %s136
        $region24: #{tpu_custom_call.1} parent=15 // pred_fallthru
          _
      $region16: #{tpu_custom_call.1} parent=5 // pred_fallthru
        _
      %p150 = scmp.le.s32.totalorder 1, %s17
      %p151 = scmp.lt.s32.totalorder %s17, 9
      %p152 = pnand %p150, %p151
      %p153 = pneg %p152
      // Predicated region
      $region25: #{tpu_custom_call.1} parent=5 // pred_check
        _
      $region26: #{tpu_custom_call.1} parent=5 // pred_check_branch
        %155 = sbr.rel (%p152) target = $region28
      $region27: #{tpu_custom_call.1} parent=5 // pred_region
        %s156 = ssub.s32 %s17, 1
        %s157 = sand.u32 %s30, 1
        %s158 = scalar_lea.sflag [#allocation3], %s157
        %s159 = sand.u32 %s30, 1
        %s160 = smul.addr %s159, 8
        %s161 = scalar_lea.vmem [#allocation2], %s160
        // Predicated region
        $region29: #{tpu_custom_call.1} parent=27 // pred_check
          %p162 = pneg %p43
        $region30: #{tpu_custom_call.1} parent=27 // pred_check_branch
          %164 = sbr.rel (%p162) target = $region32
        $region31: #{tpu_custom_call.1} parent=27 // pred_region
          %165 = dma.done %s158, 128
        $region32: #{tpu_custom_call.1} parent=27 // pred_fallthru
          _
        %s166 = sand.u32 %s56, 1
        %s167 = scalar_lea.sflag [#allocation6], %s166
        %s168 = sand.u32 %s56, 1
        %s169 = smul.addr %s168, 8
        %s170 = scalar_lea.vmem [#allocation5], %s169
        // Predicated region
        $region33: #{tpu_custom_call.1} parent=27 // pred_check
          %p171 = pneg %p69
        $region34: #{tpu_custom_call.1} parent=27 // pred_check_branch
          %173 = sbr.rel (%p171) target = $region36
        $region35: #{tpu_custom_call.1} parent=27 // pred_region
          %174 = dma.done %s167, 128
        $region36: #{tpu_custom_call.1} parent=27 // pred_fallthru
          _
        %s175 = sand.u32 %s30, 1
        %s176 = scalar_lea.sflag [#allocation3], %s175
        %s177 = sand.u32 %s30, 1
        %s178 = smul.addr %s177, 8
        %s179 = scalar_lea.vmem [#allocation2], %s178
        %p180 = pneg %p43
        %p181 = pneg %p40
        %s182 = sand.u32 %s56, 1
        %s183 = scalar_lea.sflag [#allocation6], %s182
        %s184 = sand.u32 %s56, 1
        %s185 = smul.addr %s184, 8
        %s186 = scalar_lea.vmem [#allocation5], %s185
        %p187 = pneg %p69
        %p188 = pneg %p66
        %p189 = pneg %p95
        %p190 = pneg %p92
        %s191 = sand.u32 %s82, 1
        %s192 = scalar_lea.sflag [#allocation4], %s191
        %s193 = sand.u32 %s82, 1
        %s194 = scalar_lea.vmem [#allocation7], %s193
        %v195 = vld [vmem:[%s161] sm:$0xff]
        %v196 = vld [vmem:[%s170] sm:$0xff]
        %v197 = vxor.u32 %v195, 2147483648
        %v198 = vmul.f32 %v197, 1.442695
        %v199 = vpow.pop %v198
        %v200 = vadd.f32 %v199, 1.0
        %v201 = vrcp.pop %v200
        %v202 = vmul.f32 1.0, %v201
        %v203 = vsub.f32 1.0, %v202
        %v204 = vadd.f32 %v203, 0.05
        %v205 = vmin.f32 %v204, 1.0
        %vm206 = vcmp.gt.f32.partialorder %v196, 0.0
        %v207 = vsel %vm206, %v202, %v205
        %v208 = vmax.f32 %v207, 1e-08
        %v209 = vlog2.pop %v208
        %v210 = vmul.f32 %v209, 0.6931472
        %v211 = vsub.f32 1.0, %v207
        %v212 = vmul.f32 %v211, %v211
        %v213 = vmul.f32 %v212, %v212
        %v214 = vsel %vm206, %v211, %v213
        %v215 = vmul.f32 %v210, %v214
        %v216 = vrot.slane %v215, 4
        %v217 = vadd.f32 %v215, %v216
        %v218 = vrot.slane %v217, 2
        %v219 = vadd.f32 %v217, %v218
        %v220 = vrot.slane %v219, 1
        %v221 = vadd.f32 %v219, %v220
        %222 = vst [vmem:[%s194] sm:$0x1] %v221
        %s223 = sand.u32 %s82, 1
        %s224 = scalar_lea.sflag [#allocation4], %s223
        %s225 = sand.u32 %s82, 1
        %s226 = scalar_lea.vmem [#allocation7], %s225
        // Predicated region
        $region37: #{tpu_custom_call.1} parent=27 // pred_check
          %p227 = pneg %p92
        $region38: #{tpu_custom_call.1} parent=27 // pred_check_branch
          %229 = sbr.rel (%p227) target = $region40
        $region39: #{tpu_custom_call.1} parent=27 // pred_region
          %s231 = ssub.s32 16, 16
          %232 = vsyncadd %s224, %s231
          %s233 = smul.addr %s22, 16
          %s234 = scalar_lea.hbm %s2, %s233
          %s236 = sshll.u32 %s226, 4
          %s237 = int_to_ptr.vmem [resolvable:$true] %s236
          %239 = dma.vmem_to_hbm [thread:$0]  %s237, 16, %s234, %s224
        $region40: #{tpu_custom_call.1} parent=27 // pred_fallthru
          _
      $region28: #{tpu_custom_call.1} parent=5 // pred_fallthru
        _
      %p240 = scmp.le.s32.totalorder 2, %s17
      // Predicated region
      $region41: #{tpu_custom_call.1} parent=5 // pred_check
        %p241 = pneg %p240
      $region42: #{tpu_custom_call.1} parent=5 // pred_check_branch
        %243 = sbr.rel (%p241) target = $region44
      $region43: #{tpu_custom_call.1} parent=5 // pred_region
        %s244 = ssub.s32 %s17, 2
        // Predicated region
        $region45: #{tpu_custom_call.1} parent=43 // pred_check
          %p245 = pneg %p98
        $region46: #{tpu_custom_call.1} parent=43 // pred_check_branch
          %247 = sbr.rel (%p245) target = $region48
        $region47: #{tpu_custom_call.1} parent=43 // pred_region
          %s248 = sand.u32 %s83, 1
          %s249 = scalar_lea.sflag [#allocation4], %s248
          %s250 = sand.u32 %s83, 1
          %s251 = scalar_lea.vmem [#allocation7], %s250
          %252 = dma.done %s249, 16
        $region48: #{tpu_custom_call.1} parent=43 // pred_fallthru
          _
      $region44: #{tpu_custom_call.1} parent=5 // pred_fallthru
        _
    $region6: #{tpu_custom_call.1} parent=1 // loop_footer
      %s21 = sadd.s32 1, %s17
    $region7: #{tpu_custom_call.1} parent=1 // loop_footer_branch
      %16 = sbr.rel target = $region3
    $region8: #{tpu_custom_call.1} parent=1 // loop_exit
      _
    %253 = vsyncpa [#allocation3], 1
    %s254 = scalar_lea.sflag [#allocation3], 1
    %255 = vsyncpa %s254, 1
    %256 = vsyncpa [#allocation6], 1
    %s257 = scalar_lea.sflag [#allocation6], 1
    %258 = vsyncpa %s257, 1
    %259 = vsyncpa [#allocation4], 1
    %s260 = scalar_lea.sflag [#allocation4], 1
    %261 = vsyncpa %s260, 1

</llo_original>
